<compile_context>
chip_gen: v6e
topology: v6e:2x2x1
jax: 0.10.0
libtpu: 0.0.40
codegen_flags: <defaults>
</compile_context>

<pallas_src>
import jax
import jax.numpy as jnp
from jax.experimental import pallas as pl
from jax.experimental.pallas import tpu as pltpu


def _round_up(x, m):
    return (x + m - 1) // m * m


def neep_kernel(xt_ref, xrt_ref,
                w1_ref, b1_ref,
                w2_ref, b2_ref,
                w3_ref, b3_ref,
                w4_ref,
                o_ref):
    """One batch tile, batch-in-lanes layout.

    xt_ref  : (2*n_in, TB) bf16  -- cat(s1, s2)^T  (forward ordering)
    xrt_ref : (2*n_in, TB) bf16  -- cat(s2, s1)^T  (swapped ordering)
    w1/2/3  : transposed weights (out_feat, in_feat), bf16
    b1/2/3  : biases as (H, 1) f32 columns
    w4_ref  : (H, 1) f32 final-layer weight column (b4 cancels and is dropped)
    o_ref   : (1, TB) f32 lane-dense output
    """
    TB = xt_ref.shape[1]

    # Stack forward + swapped orderings along the lane (batch) axis.
    x = jnp.concatenate([xt_ref[...], xrt_ref[...]], axis=1)       # (2n_in, 2TB)

    # Layer 1: (H, 2n_in) @ (2n_in, 2TB) -> (H, 2TB), f32 accumulate.
    h = jnp.dot(w1_ref[...], x, preferred_element_type=jnp.float32) + b1_ref[...]
    h = jnp.maximum(h, 0.0)

    h = jnp.dot(w2_ref[...], h.astype(w2_ref.dtype),
                preferred_element_type=jnp.float32) + b2_ref[...]
    h = jnp.maximum(h, 0.0)

    h = jnp.dot(w3_ref[...], h.astype(w3_ref.dtype),
                preferred_element_type=jnp.float32) + b3_ref[...]
    h = jnp.maximum(h, 0.0)

    # Final layer is linear -> subtraction commutes, b4 cancels:
    #   h(x) - h(xr) = w4 . (relu3(x) - relu3(xr))
    d = h[:, :TB] - h[:, TB:]                                       # (H, TB) f32
    o_ref[...] = jnp.sum(d * w4_ref[...], axis=0, keepdims=True)    # (1, TB) f32


def neep_forward(s1, s2, params, *, block_b=2048):
    """NEEP forward pass. s1, s2: (B, n_input) float32. Returns (B, 1) float32."""
    w1, b1, w2, b2, w3, b3, w4, b4 = params
    del b4  # cancels exactly in h(x) - h(xr)
    B, n_in = s1.shape
    H = w1.shape[1]

    # Batch-in-lanes operands (cheap wrapper-side concat + transpose, bf16).
    xt = jnp.concatenate([s1, s2], axis=-1).T.astype(jnp.bfloat16)    # (2n_in, B)
    xrt = jnp.concatenate([s2, s1], axis=-1).T.astype(jnp.bfloat16)   # (2n_in, B)

    w1t = w1.T.astype(jnp.bfloat16)      # (H, 2n_in)
    w2t = w2.T.astype(jnp.bfloat16)      # (H, H)
    w3t = w3.T.astype(jnp.bfloat16)      # (H, H)
    b1c = b1.reshape(H, 1)               # f32
    b2c = b2.reshape(H, 1)
    b3c = b3.reshape(H, 1)
    w4c = w4.reshape(H, 1)               # f32: final layer stays on VPU/XLU in f32

    # Lane-dense batch tile (multiple of 128); cap so the grid has >= 2 steps
    # for larger batches (v7x megacore / headroom under 64 MiB VMEM).
    TB = min(block_b, _round_up(B, 128))
    if B > 128:
        TB = min(TB, _round_up(-(-B // 2), 128))
    Bp = _round_up(B, TB)
    if Bp != B:
        pad = ((0, 0), (0, Bp - B))
        xt = jnp.pad(xt, pad)
        xrt = jnp.pad(xrt, pad)

    grid = (Bp // TB,)
    const = lambda i: (0, 0)   # weights/biases resident in VMEM across steps
    tile = lambda i: (0, i)    # batch tiled along lanes

    # Advisory cost estimate.
    flops = 2 * (2 * Bp) * (2 * n_in * H + 2 * H * H) + 2 * H * Bp
    bytes_accessed = (2 * Bp * 2 * n_in * 2            # bf16 inputs
                      + Bp * 4                          # f32 output
                      + (2 * n_in * H + 2 * H * H) * 2  # bf16 weights
                      + (3 * H + H) * 4)                # f32 biases + w4

    out = pl.pallas_call(
        neep_kernel,
        out_shape=jax.ShapeDtypeStruct((1, Bp), jnp.float32),
        grid=grid,
        in_specs=[
            pl.BlockSpec((2 * n_in, TB), tile),    # xt
            pl.BlockSpec((2 * n_in, TB), tile),    # xrt
            pl.BlockSpec((H, 2 * n_in), const),    # w1^T
            pl.BlockSpec((H, 1), const),           # b1
            pl.BlockSpec((H, H), const),           # w2^T
            pl.BlockSpec((H, 1), const),           # b2
            pl.BlockSpec((H, H), const),           # w3^T
            pl.BlockSpec((H, 1), const),           # b3
            pl.BlockSpec((H, 1), const),           # w4
        ],
        out_specs=pl.BlockSpec((1, TB), tile),
        compiler_params=pltpu.CompilerParams(
            dimension_semantics=("parallel",)),
        cost_estimate=pl.CostEstimate(
            flops=int(flops), transcendentals=0,
            bytes_accessed=int(bytes_accessed)),
    )(xt, xrt, w1t, b1c, w2t, b2c, w3t, b3c, w4c)

    return out[0, :B].reshape(B, 1)


def init_params(key, n_input, n_hidden):
    """Deterministic init mimicking PyTorch Linear default (uniform +/- 1/sqrt(fan_in)).

    Weights stored as (fan_in, fan_out); biases as (1, fan_out).
    """
    dims = [(2 * n_input, n_hidden),
            (n_hidden, n_hidden),
            (n_hidden, n_hidden),
            (n_hidden, 1)]
    params = []
    for (fan_in, fan_out) in dims:
        key, kw, kb = jax.random.split(key, 3)
        bound = 1.0 / jnp.sqrt(float(fan_in))
        w = jax.random.uniform(kw, (fan_in, fan_out), jnp.float32, -bound, bound)
        b = jax.random.uniform(kb, (1, fan_out), jnp.float32, -bound, bound)
        params += [w, b]
    return tuple(params)


def neep_reference(s1, s2, params):
    """Plain-JAX f32 reference of the PyTorch forward."""
    w1, b1, w2, b2, w3, b3, w4, b4 = params

    def h(x):
        x = jnp.maximum(x @ w1 + b1, 0.0)
        x = jnp.maximum(x @ w2 + b2, 0.0)
        x = jnp.maximum(x @ w3 + b3, 0.0)
        return x @ w4 + b4

    x = jnp.concatenate([s1, s2], axis=-1)
    xr = jnp.concatenate([s2, s1], axis=-1)
    return h(x) - h(xr)


if __name__ == "__main__":
    # Small shapes consistent with the module: opt.n_input=4, opt.n_hidden=32.
    n_input, n_hidden, batch = 4, 32, 8

    key = jax.random.PRNGKey(0)
    kp, k1, k2 = jax.random.split(key, 3)
    params = init_params(kp, n_input, n_hidden)

    s1 = jax.random.normal(k1, (batch, n_input), jnp.float32)
    s2 = jax.random.normal(k2, (batch, n_input), jnp.float32)

    out = jax.block_until_ready(neep_forward(s1, s2, params))
    ref = neep_reference(s1, s2, params)
    assert out.shape == (batch, 1), out.shape
    # bf16 matmul operands (f32 accumulate): loosened tolerance vs the f32 reference.
    assert jnp.allclose(out, ref, atol=5e-2, rtol=5e-2), (out, ref)

    # Second check exercising the tiled + padded path (grid > 1, B % TB != 0).
    batch2 = 1000
    k3, k4 = jax.random.split(k2)
    s1b = jax.random.normal(k3, (batch2, n_input), jnp.float32)
    s2b = jax.random.normal(k4, (batch2, n_input), jnp.float32)
    out2 = jax.block_until_ready(neep_forward(s1b, s2b, params, block_b=256))
    ref2 = neep_reference(s1b, s2b, params)
    assert out2.shape == (batch2, 1), out2.shape
    assert jnp.allclose(out2, ref2, atol=5e-2, rtol=5e-2)

    print("KERNEL_OK")
</pallas_src>

<mosaic_0001>
module attributes {stable_mosaic.version = 11 : i64} {
  func.func @neep_kernel(%arg0: i32, %arg1: memref<8x128xbf16, #tpu.memory_space<vmem>>, %arg2: memref<8x128xbf16, #tpu.memory_space<vmem>>, %arg3: memref<32x8xbf16, #tpu.memory_space<vmem>>, %arg4: memref<32x1xf32, #tpu.memory_space<vmem>>, %arg5: memref<32x32xbf16, #tpu.memory_space<vmem>>, %arg6: memref<32x1xf32, #tpu.memory_space<vmem>>, %arg7: memref<32x32xbf16, #tpu.memory_space<vmem>>, %arg8: memref<32x1xf32, #tpu.memory_space<vmem>>, %arg9: memref<32x1xf32, #tpu.memory_space<vmem>>, %arg10: memref<1x128xf32, #tpu.memory_space<vmem>>) attributes {dimension_semantics = [#tpu.dimension_semantics<parallel>], iteration_bounds = array<i64: 1>, scalar_prefetch = 0 : i64, scratch_operands = 0 : i64, tpu.core_type = #tpu.core_type<tc>, window_params = [{transform_indices = @transform_0, window_bounds = array<i64: 8, 128>}, {transform_indices = @transform_1, window_bounds = array<i64: 8, 128>}, {pipeline_mode = #tpu.pipeline_mode<synchronous>, transform_indices = @transform_2, window_bounds = array<i64: 32, 8>}, {pipeline_mode = #tpu.pipeline_mode<synchronous>, transform_indices = @transform_3, window_bounds = array<i64: 32, 1>}, {pipeline_mode = #tpu.pipeline_mode<synchronous>, transform_indices = @transform_4, window_bounds = array<i64: 32, 32>}, {pipeline_mode = #tpu.pipeline_mode<synchronous>, transform_indices = @transform_5, window_bounds = array<i64: 32, 1>}, {pipeline_mode = #tpu.pipeline_mode<synchronous>, transform_indices = @transform_6, window_bounds = array<i64: 32, 32>}, {pipeline_mode = #tpu.pipeline_mode<synchronous>, transform_indices = @transform_7, window_bounds = array<i64: 32, 1>}, {pipeline_mode = #tpu.pipeline_mode<synchronous>, transform_indices = @transform_8, window_bounds = array<i64: 32, 1>}, {transform_indices = @transform_9, window_bounds = array<i64: 1, 128>}]} {
    %c0 = arith.constant 0 : index
    %c0_0 = arith.constant 0 : index
    %0 = vector.load %arg1[%c0, %c0_0] : memref<8x128xbf16, #tpu.memory_space<vmem>>, vector<8x128xbf16>
    %c0_1 = arith.constant 0 : index
    %c0_2 = arith.constant 0 : index
    %1 = vector.load %arg2[%c0_1, %c0_2] : memref<8x128xbf16, #tpu.memory_space<vmem>>, vector<8x128xbf16>
    %2 = tpu.concatenate %0, %1 in 1 : vector<8x128xbf16>, vector<8x128xbf16> -> vector<8x256xbf16>
    %c0_3 = arith.constant 0 : index
    %c0_4 = arith.constant 0 : index
    %3 = vector.load %arg3[%c0_3, %c0_4] : memref<32x8xbf16, #tpu.memory_space<vmem>>, vector<32x8xbf16>
    %cst = arith.constant dense<0.000000e+00> : vector<32x256xf32>
    %4 = tpu.matmul %3, %2, %cst {dimension_numbers = #tpu.dot_dimension_numbers<[1], [0], [0], [1], [0, 0, 1, 1], [], []>} : vector<32x8xbf16>, vector<8x256xbf16>, vector<32x256xf32> -> vector<32x256xf32>
    %c0_5 = arith.constant 0 : index
    %c0_6 = arith.constant 0 : index
    %5 = vector.load %arg4[%c0_5, %c0_6] : memref<32x1xf32, #tpu.memory_space<vmem>>, vector<32x1xf32>
    %6 = vector.broadcast %5 : vector<32x1xf32> to vector<32x256xf32>
    %7 = arith.addf %4, %6 : vector<32x256xf32>
    %cst_7 = arith.constant 0.000000e+00 : f32
    %8 = vector.broadcast %cst_7 : f32 to vector<32x256xf32>
    %9 = arith.maximumf %7, %8 : vector<32x256xf32>
    %c0_8 = arith.constant 0 : index
    %c0_9 = arith.constant 0 : index
    %10 = vector.load %arg5[%c0_8, %c0_9] : memref<32x32xbf16, #tpu.memory_space<vmem>>, vector<32x32xbf16>
    %11 = arith.truncf %9 : vector<32x256xf32> to vector<32x256xbf16>
    %cst_10 = arith.constant dense<0.000000e+00> : vector<32x256xf32>
    %12 = tpu.matmul %10, %11, %cst_10 {dimension_numbers = #tpu.dot_dimension_numbers<[1], [0], [0], [1], [0, 0, 1, 1], [], []>} : vector<32x32xbf16>, vector<32x256xbf16>, vector<32x256xf32> -> vector<32x256xf32>
    %c0_11 = arith.constant 0 : index
    %c0_12 = arith.constant 0 : index
    %13 = vector.load %arg6[%c0_11, %c0_12] : memref<32x1xf32, #tpu.memory_space<vmem>>, vector<32x1xf32>
    %14 = vector.broadcast %13 : vector<32x1xf32> to vector<32x256xf32>
    %15 = arith.addf %12, %14 : vector<32x256xf32>
    %cst_13 = arith.constant 0.000000e+00 : f32
    %16 = vector.broadcast %cst_13 : f32 to vector<32x256xf32>
    %17 = arith.maximumf %15, %16 : vector<32x256xf32>
    %c0_14 = arith.constant 0 : index
    %c0_15 = arith.constant 0 : index
    %18 = vector.load %arg7[%c0_14, %c0_15] : memref<32x32xbf16, #tpu.memory_space<vmem>>, vector<32x32xbf16>
    %19 = arith.truncf %17 : vector<32x256xf32> to vector<32x256xbf16>
    %cst_16 = arith.constant dense<0.000000e+00> : vector<32x256xf32>
    %20 = tpu.matmul %18, %19, %cst_16 {dimension_numbers = #tpu.dot_dimension_numbers<[1], [0], [0], [1], [0, 0, 1, 1], [], []>} : vector<32x32xbf16>, vector<32x256xbf16>, vector<32x256xf32> -> vector<32x256xf32>
    %c0_17 = arith.constant 0 : index
    %c0_18 = arith.constant 0 : index
    %21 = vector.load %arg8[%c0_17, %c0_18] : memref<32x1xf32, #tpu.memory_space<vmem>>, vector<32x1xf32>
    %22 = vector.broadcast %21 : vector<32x1xf32> to vector<32x256xf32>
    %23 = arith.addf %20, %22 : vector<32x256xf32>
    %cst_19 = arith.constant 0.000000e+00 : f32
    %24 = vector.broadcast %cst_19 : f32 to vector<32x256xf32>
    %25 = arith.maximumf %23, %24 : vector<32x256xf32>
    %26 = vector.extract_strided_slice %25 {offsets = [0, 0], sizes = [32, 128], strides = [1, 1]} : vector<32x256xf32> to vector<32x128xf32>
    %27 = vector.extract_strided_slice %25 {offsets = [0, 128], sizes = [32, 128], strides = [1, 1]} : vector<32x256xf32> to vector<32x128xf32>
    %28 = arith.subf %26, %27 : vector<32x128xf32>
    %c0_20 = arith.constant 0 : index
    %c0_21 = arith.constant 0 : index
    %29 = vector.load %arg9[%c0_20, %c0_21] : memref<32x1xf32, #tpu.memory_space<vmem>>, vector<32x1xf32>
    %30 = vector.broadcast %29 : vector<32x1xf32> to vector<32x128xf32>
    %31 = arith.mulf %28, %30 : vector<32x128xf32>
    %cst_22 = arith.constant dense<0.000000e+00> : vector<128xf32>
    %32 = vector.multi_reduction <add>, %31, %cst_22 [0] : vector<32x128xf32> to vector<128xf32>
    %33 = vector.shape_cast %32 : vector<128xf32> to vector<1x128xf32>
    %c0_23 = arith.constant 0 : index
    %c0_24 = arith.constant 0 : index
    %34 = vector.load %arg10[%c0_23, %c0_24] : memref<1x128xf32, #tpu.memory_space<vmem>>, vector<1x128xf32>
    tpu.vector_store %arg10[%c0_23, %c0_24], %33 {strides = array<i32>} : memref<1x128xf32, #tpu.memory_space<vmem>>, vector<1x128xf32>,
    return
  }
  func.func @transform_0(%arg0: i32) -> (i32, i32) {
    %c0_i32 = arith.constant 0 : i32
    %c0_i32_0 = arith.constant 0 : i32
    return %c0_i32, %arg0 : i32, i32
  }
  func.func @transform_1(%arg0: i32) -> (i32, i32) {
    %c0_i32 = arith.constant 0 : i32
    %c0_i32_0 = arith.constant 0 : i32
    return %c0_i32, %arg0 : i32, i32
  }
  func.func @transform_2(%arg0: i32) -> (i32, i32) {
    %c0_i32 = arith.constant 0 : i32
    %c0_i32_0 = arith.constant 0 : i32
    %c0_i32_1 = arith.constant 0 : i32
    return %c0_i32, %c0_i32_0 : i32, i32
  }
  func.func @transform_3(%arg0: i32) -> (i32, i32) {
    %c0_i32 = arith.constant 0 : i32
    %c0_i32_0 = arith.constant 0 : i32
    %c0_i32_1 = arith.constant 0 : i32
    return %c0_i32, %c0_i32_0 : i32, i32
  }
  func.func @transform_4(%arg0: i32) -> (i32, i32) {
    %c0_i32 = arith.constant 0 : i32
    %c0_i32_0 = arith.constant 0 : i32
    %c0_i32_1 = arith.constant 0 : i32
    return %c0_i32, %c0_i32_0 : i32, i32
  }
  func.func @transform_5(%arg0: i32) -> (i32, i32) {
    %c0_i32 = arith.constant 0 : i32
    %c0_i32_0 = arith.constant 0 : i32
    %c0_i32_1 = arith.constant 0 : i32
    return %c0_i32, %c0_i32_0 : i32, i32
  }
  func.func @transform_6(%arg0: i32) -> (i32, i32) {
    %c0_i32 = arith.constant 0 : i32
    %c0_i32_0 = arith.constant 0 : i32
    %c0_i32_1 = arith.constant 0 : i32
    return %c0_i32, %c0_i32_0 : i32, i32
  }
  func.func @transform_7(%arg0: i32) -> (i32, i32) {
    %c0_i32 = arith.constant 0 : i32
    %c0_i32_0 = arith.constant 0 : i32
    %c0_i32_1 = arith.constant 0 : i32
    return %c0_i32, %c0_i32_0 : i32, i32
  }
  func.func @transform_8(%arg0: i32) -> (i32, i32) {
    %c0_i32 = arith.constant 0 : i32
    %c0_i32_0 = arith.constant 0 : i32
    %c0_i32_1 = arith.constant 0 : i32
    return %c0_i32, %c0_i32_0 : i32, i32
  }
  func.func @transform_9(%arg0: i32) -> (i32, i32) {
    %c0_i32 = arith.constant 0 : i32
    %c0_i32_0 = arith.constant 0 : i32
    return %c0_i32, %arg0 : i32, i32
  }
}

</mosaic_0001>

<llo_original>
// kernel: tpu_custom_call.1
$region0: #{tpu_custom_call.1}
  #allocation0 [shape = 'u32[]', space=smem, size = 0x4, offset = 0x4, fixed_abs, tag = 'smem constant byte address 0x4 - core index']
  #allocation1 [shape = 'u32[144,128]{1,0:T(1,128)}', space=vmem, size = 0x12000, scoped, tag = 'internal scratch']
  %s0 = inlined_call_operand.vmem [shape: bf16[8,128], index: 0, kind: input, shape index: {}]
  %s1 = inlined_call_operand.vmem [shape: bf16[8,128], index: 1, kind: input, shape index: {}]
  %s2 = inlined_call_operand.vmem [shape: bf16[32,8], index: 2, kind: input, shape index: {}]
  %s3 = inlined_call_operand.vmem [shape: f32[32,1], index: 3, kind: input, shape index: {}]
  %s4 = inlined_call_operand.vmem [shape: bf16[32,32], index: 4, kind: input, shape index: {}]
  %s5 = inlined_call_operand.vmem [shape: f32[32,1], index: 5, kind: input, shape index: {}]
  %s6 = inlined_call_operand.vmem [shape: bf16[32,32], index: 6, kind: input, shape index: {}]
  %s7 = inlined_call_operand.vmem [shape: f32[32,1], index: 7, kind: input, shape index: {}]
  %s8 = inlined_call_operand.vmem [shape: f32[32,1], index: 8, kind: input, shape index: {}]
  %s9 = inlined_call_operand.hbm [shape: f32[1,128], index: 9, kind: output, shape index: {}]
  %s10 = sld [smem:[#allocation0]]
  $region46: #{tpu_custom_call.1} parent=0
    _
  %s12 = ssub.s32 1, %s10
  %s13 = scalar_select 0, %s12, %s10
  $region1: #{tpu_custom_call.1} parent=0
    #allocation2 [shape = 'u8[512]{0}', space=vmem, size = 0x400, scoped, tag = 'output window, operand 0, single buffered']
    #allocation3 [shape = 's32[1]{0}', space=sflag, size = 0x4, scoped, tag = 'scoped memory for tpu_custom_call.1']
    %14 = vsyncpa [#allocation3], 0
    // Predicated region
    $region2: #{tpu_custom_call.1} parent=1 // pred_check
      _
    $region3: #{tpu_custom_call.1} parent=1 // pred_check_branch
      %16 = sbr.rel (0) target = $region5
    $region4: #{tpu_custom_call.1} parent=1 // pred_region
      _
    $region5: #{tpu_custom_call.1} parent=1 // pred_fallthru
      _
    // Predicated region
    $region6: #{tpu_custom_call.1} parent=1 // pred_check
      _
    $region7: #{tpu_custom_call.1} parent=1 // pred_check_branch
      %18 = sbr.rel (0) target = $region9
    $region8: #{tpu_custom_call.1} parent=1 // pred_region
      _
    $region9: #{tpu_custom_call.1} parent=1 // pred_fallthru
      _
    // Predicated region
    $region10: #{tpu_custom_call.1} parent=1 // pred_check
      _
    $region11: #{tpu_custom_call.1} parent=1 // pred_check_branch
      %20 = sbr.rel (0) target = $region13
    $region12: #{tpu_custom_call.1} parent=1 // pred_region
      _
    $region13: #{tpu_custom_call.1} parent=1 // pred_fallthru
      _
    // Predicated region
    $region14: #{tpu_custom_call.1} parent=1 // pred_check
      _
    $region15: #{tpu_custom_call.1} parent=1 // pred_check_branch
      %22 = sbr.rel (0) target = $region17
    $region16: #{tpu_custom_call.1} parent=1 // pred_region
      _
    $region17: #{tpu_custom_call.1} parent=1 // pred_fallthru
      _
    // Predicated region
    $region18: #{tpu_custom_call.1} parent=1 // pred_check
      _
    $region19: #{tpu_custom_call.1} parent=1 // pred_check_branch
      %24 = sbr.rel (0) target = $region21
    $region20: #{tpu_custom_call.1} parent=1 // pred_region
      _
    $region21: #{tpu_custom_call.1} parent=1 // pred_fallthru
      _
    // Predicated region
    $region22: #{tpu_custom_call.1} parent=1 // pred_check
      _
    $region23: #{tpu_custom_call.1} parent=1 // pred_check_branch
      %26 = sbr.rel (0) target = $region25
    $region24: #{tpu_custom_call.1} parent=1 // pred_region
      _
    $region25: #{tpu_custom_call.1} parent=1 // pred_fallthru
      _
    // Predicated region
    $region26: #{tpu_custom_call.1} parent=1 // pred_check
      _
    $region27: #{tpu_custom_call.1} parent=1 // pred_check_branch
      %28 = sbr.rel (0) target = $region29
    $region28: #{tpu_custom_call.1} parent=1 // pred_region
      _
    $region29: #{tpu_custom_call.1} parent=1 // pred_fallthru
      _
    // Predicated region
    $region30: #{tpu_custom_call.1} parent=1 // pred_check
      _
    $region31: #{tpu_custom_call.1} parent=1 // pred_check_branch
      %30 = sbr.rel (0) target = $region33
    $region32: #{tpu_custom_call.1} parent=1 // pred_region
      _
    $region33: #{tpu_custom_call.1} parent=1 // pred_fallthru
      _
    // Predicated region
    $region34: #{tpu_custom_call.1} parent=1 // pred_check
      _
    $region35: #{tpu_custom_call.1} parent=1 // pred_check_branch
      %32 = sbr.rel (0) target = $region37
    $region36: #{tpu_custom_call.1} parent=1 // pred_region
      _
    $region37: #{tpu_custom_call.1} parent=1 // pred_fallthru
      _
    %v34 = vld [vmem:[%s0] sm:$0xf]
    %v35 = vld [vmem:[%s1] sm:$0xf]
    %v36 = vld [vmem:[%s2] sm:$0xf]
    %v37 = vld [vmem:[%s2 + $0x4] sm:$0xf]
    %v38 = vld [vmem:[%s2 + $0x8] sm:$0xf]
    %v39 = vld [vmem:[%s2 + $0xc] sm:$0xf]
    %v40 = vld [vmem:[%s3] sm:$0xff]
    %v41 = vld [vmem:[%s3 + $0x8] sm:$0xff]
    %v42 = vld [vmem:[%s3 + $0x10] sm:$0xff]
    %v43 = vld [vmem:[%s3 + $0x18] sm:$0xff]
    %45 = vset.pattern.permute.xlu0 0
    %46 = vperm.xlu0 %45, %v40
    %v47 = vpop.permute.xlu0 %46
    %50 = vset.pattern.permute.xlu0 0
    %51 = vperm.xlu0 %50, %v41
    %v52 = vpop.permute.xlu0 %51
    %55 = vset.pattern.permute.xlu0 0
    %56 = vperm.xlu0 %55, %v42
    %v57 = vpop.permute.xlu0 %56
    %60 = vset.pattern.permute.xlu0 0
    %61 = vperm.xlu0 %60, %v43
    %v62 = vpop.permute.xlu0 %61
    %v68 = vunpack.c.l.b16 %v36
    %v69 = vunpack.c.l.b16 %v37
    %v70 = vunpack.c.l.b16 %v38
    %v71 = vunpack.c.l.b16 %v39
    %v72 = vpack.c.b16 %v69, %v68
    %v73 = vpack.c.b16 %v71, %v70
    %vm74 = vcmask 64512
    %v76 = vsel %vm74, %v72, 0
    %v79 = vsel %vm74, %v73, 0
    %vm81 = vcmask 1043456
    %v83 = vsel %vm81, %v34, 0
    %v86 = vsel %vm81, %v35, 0
    %88 = vmatprep.subr.bf16.mxu0 0
    %89 = vmatpush1.bf16.msra.mxu0 0
    %90 = vmatprep.subr.bf16.mxu0 0
    %91 = vmatpush1.bf16.msra.mxu0 0
    %92 = vmatprep.subr.bf16.mxu0 0
    %93 = vmatpush1.bf16.msra.mxu0 0
    %94 = vmatprep.subr.bf16.mxu0 0
    %95 = vmatpush1.bf16.msra.mxu0 0
    %96 = vmatprep.subr.bf16.mxu0 0
    %97 = vmatpush1.bf16.msra.mxu0 0
    %98 = vmatprep.subr.bf16.mxu0 0
    %99 = vmatpush1.bf16.msra.mxu0 0
    %100 = vmatprep.subr.bf16.mxu0 0
    %101 = vmatpush1.bf16.msra.mxu0 0
    %102 = vmatprep.subr.bf16.mxu0 %v86
    %103 = vmatpush1.bf16.msra.mxu0 %v83
    %104 = vmatprep.subr.bf16.mxu0 0
    %105 = vmatpush2.bf16.msra.mxu0 0
    %106 = vmatprep.subr.bf16.mxu0 0
    %107 = vmatpush2.bf16.msra.mxu0 0
    %108 = vmatprep.subr.bf16.mxu0 0
    %109 = vmatpush2.bf16.msra.mxu0 0
    %110 = vmatprep.subr.bf16.mxu0 0
    %111 = vmatpush2.bf16.msra.mxu0 0
    %112 = vmatprep.subr.bf16.mxu0 0
    %113 = vmatpush2.bf16.msra.mxu0 0
    %114 = vmatprep.subr.bf16.mxu0 0
    %115 = vmatpush2.bf16.msra.mxu0 0
    %116 = vmatprep.subr.bf16.mxu0 0
    %117 = vmatpush2.bf16.msra.mxu0 0
    %118 = vmatprep.subr.bf16.mxu0 0
    %119 = vmatpush2.bf16.msra.mxu0 0
    %120 = vmatprep.mubr.bf16.mxu0 0
    %121 = vmatmul.mubr.bf16.gmra.mxu0 %v76
    %v122 = vpop.f32.mrf.mxu0
    %v123 = vadd.f32 %v47, %v122
    %v124 = vpop.f32.mrf.mxu0
    %v125 = vadd.f32 %v47, %v124
    %v126 = vpop.f32.mrf.mxu0
    %v127 = vadd.f32 %v52, %v126
    %v128 = vpop.f32.mrf.mxu0
    %v129 = vadd.f32 %v52, %v128
    %130 = vmatprep.mubr.bf16.mxu0 0
    %131 = vmatmul.mubr.bf16.gmra.mxu0 %v79
    %v132 = vpop.f32.mrf.mxu0
    %v133 = vadd.f32 %v57, %v132
    %v134 = vpop.f32.mrf.mxu0
    %v135 = vadd.f32 %v57, %v134
    %v136 = vpop.f32.mrf.mxu0
    %v137 = vadd.f32 %v62, %v136
    %v138 = vpop.f32.mrf.mxu0
    %v139 = vadd.f32 %v62, %v138
    %140 = vdwg.mxu0
    %v141 = vmax.f32 %v123, 0.0
    %v142 = vmax.f32 %v125, 0.0
    %v143 = vmax.f32 %v127, 0.0
    %v144 = vmax.f32 %v129, 0.0
    %v145 = vmax.f32 %v133, 0.0
    %v146 = vmax.f32 %v135, 0.0
    %v147 = vmax.f32 %v137, 0.0
    %v148 = vmax.f32 %v139, 0.0
    %v149 = vld [vmem:[%s4] sm:$0xf]
    %v150 = vld [vmem:[%s4 + $0x4] sm:$0xf]
    %v151 = vld [vmem:[%s4 + $0x8] sm:$0xf]
    %v152 = vld [vmem:[%s4 + $0xc] sm:$0xf]
    %v153 = vpack.c.bf16 %v143, %v141
    %v154 = vpack.c.bf16 %v144, %v142
    %v155 = vpack.c.bf16 %v147, %v145
    %v156 = vpack.c.bf16 %v148, %v146
    %v157 = vld [vmem:[%s5] sm:$0xff]
    %v158 = vld [vmem:[%s5 + $0x8] sm:$0xff]
    %v159 = vld [vmem:[%s5 + $0x10] sm:$0xff]
    %v160 = vld [vmem:[%s5 + $0x18] sm:$0xff]
    %162 = vset.pattern.permute.xlu0 0
    %163 = vperm.xlu0 %162, %v157
    %v164 = vpop.permute.xlu0 %163
    %167 = vset.pattern.permute.xlu0 0
    %168 = vperm.xlu0 %167, %v158
    %v169 = vpop.permute.xlu0 %168
    %172 = vset.pattern.permute.xlu0 0
    %173 = vperm.xlu0 %172, %v159
    %v174 = vpop.permute.xlu0 %173
    %177 = vset.pattern.permute.xlu0 0
    %178 = vperm.xlu0 %177, %v160
    %v179 = vpop.permute.xlu0 %178
    %v185 = vunpack.c.l.b16 %v149
    %v186 = vunpack.c.l.b16 %v150
    %v187 = vunpack.c.l.b16 %v151
    %v188 = vunpack.c.l.b16 %v152
    %v189 = vpack.c.b16 %v186, %v185
    %v190 = vpack.c.b16 %v188, %v187
    %vm191 = vcmask 261120
    %v193 = vsel %vm191, %v189, 0
    %v196 = vsel %vm191, %v190, 0
    %198 = vmatprep.subr.bf16.mxu0 0
    %199 = vmatpush1.bf16.msra.mxu0 0
    %200 = vmatprep.subr.bf16.mxu0 0
    %201 = vmatpush1.bf16.msra.mxu0 0
    %202 = vmatprep.subr.bf16.mxu0 0
    %203 = vmatpush1.bf16.msra.mxu0 0
    %204 = vmatprep.subr.bf16.mxu0 0
    %205 = vmatpush1.bf16.msra.mxu0 0
    %206 = vmatprep.subr.bf16.mxu0 0
    %207 = vmatpush1.bf16.msra.mxu0 0
    %208 = vmatprep.subr.bf16.mxu0 0
    %209 = vmatpush1.bf16.msra.mxu0 0
    %210 = vmatprep.subr.bf16.mxu0 %v156
    %211 = vmatpush1.bf16.msra.mxu0 %v155
    %212 = vmatprep.subr.bf16.mxu0 %v154
    %213 = vmatpush1.bf16.msra.mxu0 %v153
    %214 = vmatprep.subr.bf16.mxu0 0
    %215 = vmatpush2.bf16.msra.mxu0 0
    %216 = vmatprep.subr.bf16.mxu0 0
    %217 = vmatpush2.bf16.msra.mxu0 0
    %218 = vmatprep.subr.bf16.mxu0 0
    %219 = vmatpush2.bf16.msra.mxu0 0
    %220 = vmatprep.subr.bf16.mxu0 0
    %221 = vmatpush2.bf16.msra.mxu0 0
    %222 = vmatprep.subr.bf16.mxu0 0
    %223 = vmatpush2.bf16.msra.mxu0 0
    %224 = vmatprep.subr.bf16.mxu0 0
    %225 = vmatpush2.bf16.msra.mxu0 0
    %226 = vmatprep.subr.bf16.mxu0 0
    %227 = vmatpush2.bf16.msra.mxu0 0
    %228 = vmatprep.subr.bf16.mxu0 0
    %229 = vmatpush2.bf16.msra.mxu0 0
    %230 = vmatprep.mubr.bf16.mxu0 0
    %231 = vmatmul.mubr.bf16.gmra.mxu0 %v193
    %v232 = vpop.f32.mrf.mxu0
    %v233 = vadd.f32 %v164, %v232
    %v234 = vpop.f32.mrf.mxu0
    %v235 = vadd.f32 %v164, %v234
    %v236 = vpop.f32.mrf.mxu0
    %v237 = vadd.f32 %v169, %v236
    %v238 = vpop.f32.mrf.mxu0
    %v239 = vadd.f32 %v169, %v238
    %240 = vmatprep.mubr.bf16.mxu0 0
    %241 = vmatmul.mubr.bf16.gmra.mxu0 %v196
    %v242 = vpop.f32.mrf.mxu0
    %v243 = vadd.f32 %v174, %v242
    %v244 = vpop.f32.mrf.mxu0
    %v245 = vadd.f32 %v174, %v244
    %v246 = vpop.f32.mrf.mxu0
    %v247 = vadd.f32 %v179, %v246
    %v248 = vpop.f32.mrf.mxu0
    %v249 = vadd.f32 %v179, %v248
    %250 = vdwg.mxu0
    %v251 = vmax.f32 %v233, 0.0
    %v252 = vmax.f32 %v235, 0.0
    %v253 = vmax.f32 %v237, 0.0
    %v254 = vmax.f32 %v239, 0.0
    %v255 = vmax.f32 %v243, 0.0
    %v256 = vmax.f32 %v245, 0.0
    %v257 = vmax.f32 %v247, 0.0
    %v258 = vmax.f32 %v249, 0.0
    %v259 = vld [vmem:[%s6] sm:$0xf]
    %v260 = vld [vmem:[%s6 + $0x4] sm:$0xf]
    %v261 = vld [vmem:[%s6 + $0x8] sm:$0xf]
    %v262 = vld [vmem:[%s6 + $0xc] sm:$0xf]
    %v263 = vpack.c.bf16 %v253, %v251
    %v264 = vpack.c.bf16 %v254, %v252
    %v265 = vpack.c.bf16 %v257, %v255
    %v266 = vpack.c.bf16 %v258, %v256
    %v267 = vld [vmem:[%s7] sm:$0xff]
    %v268 = vld [vmem:[%s7 + $0x8] sm:$0xff]
    %v269 = vld [vmem:[%s7 + $0x10] sm:$0xff]
    %v270 = vld [vmem:[%s7 + $0x18] sm:$0xff]
    %272 = vset.pattern.permute.xlu0 0
    %273 = vperm.xlu0 %272, %v267
    %v274 = vpop.permute.xlu0 %273
    %277 = vset.pattern.permute.xlu0 0
    %278 = vperm.xlu0 %277, %v268
    %v279 = vpop.permute.xlu0 %278
    %282 = vset.pattern.permute.xlu0 0
    %283 = vperm.xlu0 %282, %v269
    %v284 = vpop.permute.xlu0 %283
    %287 = vset.pattern.permute.xlu0 0
    %288 = vperm.xlu0 %287, %v270
    %v289 = vpop.permute.xlu0 %288
    %v295 = vunpack.c.l.b16 %v259
    %v296 = vunpack.c.l.b16 %v260
    %v297 = vunpack.c.l.b16 %v261
    %v298 = vunpack.c.l.b16 %v262
    %v299 = vpack.c.b16 %v296, %v295
    %v300 = vpack.c.b16 %v298, %v297
    %v302 = vsel %vm191, %v299, 0
    %v305 = vsel %vm191, %v300, 0
    %307 = vmatprep.subr.bf16.mxu0 0
    %308 = vmatpush1.bf16.msra.mxu0 0
    %309 = vmatprep.subr.bf16.mxu0 0
    %310 = vmatpush1.bf16.msra.mxu0 0
    %311 = vmatprep.subr.bf16.mxu0 0
    %312 = vmatpush1.bf16.msra.mxu0 0
    %313 = vmatprep.subr.bf16.mxu0 0
    %314 = vmatpush1.bf16.msra.mxu0 0
    %315 = vmatprep.subr.bf16.mxu0 0
    %316 = vmatpush1.bf16.msra.mxu0 0
    %317 = vmatprep.subr.bf16.mxu0 0
    %318 = vmatpush1.bf16.msra.mxu0 0
    %319 = vmatprep.subr.bf16.mxu0 %v266
    %320 = vmatpush1.bf16.msra.mxu0 %v265
    %321 = vmatprep.subr.bf16.mxu0 %v264
    %322 = vmatpush1.bf16.msra.mxu0 %v263
    %323 = vmatprep.subr.bf16.mxu0 0
    %324 = vmatpush2.bf16.msra.mxu0 0
    %325 = vmatprep.subr.bf16.mxu0 0
    %326 = vmatpush2.bf16.msra.mxu0 0
    %327 = vmatprep.subr.bf16.mxu0 0
    %328 = vmatpush2.bf16.msra.mxu0 0
    %329 = vmatprep.subr.bf16.mxu0 0
    %330 = vmatpush2.bf16.msra.mxu0 0
    %331 = vmatprep.subr.bf16.mxu0 0
    %332 = vmatpush2.bf16.msra.mxu0 0
    %333 = vmatprep.subr.bf16.mxu0 0
    %334 = vmatpush2.bf16.msra.mxu0 0
    %335 = vmatprep.subr.bf16.mxu0 0
    %336 = vmatpush2.bf16.msra.mxu0 0
    %337 = vmatprep.subr.bf16.mxu0 0
    %338 = vmatpush2.bf16.msra.mxu0 0
    %339 = vmatprep.mubr.bf16.mxu0 0
    %340 = vmatmul.mubr.bf16.gmra.mxu0 %v302
    %v341 = vpop.f32.mrf.mxu0
    %v342 = vadd.f32 %v274, %v341
    %v343 = vpop.f32.mrf.mxu0
    %v344 = vadd.f32 %v274, %v343
    %v345 = vpop.f32.mrf.mxu0
    %v346 = vadd.f32 %v279, %v345
    %v347 = vpop.f32.mrf.mxu0
    %v348 = vadd.f32 %v279, %v347
    %349 = vmatprep.mubr.bf16.mxu0 0
    %350 = vmatmul.mubr.bf16.gmra.mxu0 %v305
    %v351 = vpop.f32.mrf.mxu0
    %v352 = vadd.f32 %v284, %v351
    %v353 = vpop.f32.mrf.mxu0
    %v354 = vadd.f32 %v284, %v353
    %v355 = vpop.f32.mrf.mxu0
    %v356 = vadd.f32 %v289, %v355
    %v357 = vpop.f32.mrf.mxu0
    %v358 = vadd.f32 %v289, %v357
    %359 = vdwg.mxu0
    %v360 = vmax.f32 %v342, 0.0
    %v361 = vmax.f32 %v344, 0.0
    %v362 = vmax.f32 %v346, 0.0
    %v363 = vmax.f32 %v348, 0.0
    %v364 = vmax.f32 %v352, 0.0
    %v365 = vmax.f32 %v354, 0.0
    %v366 = vmax.f32 %v356, 0.0
    %v367 = vmax.f32 %v358, 0.0
    %v368 = vsub.f32 %v360, %v361
    %v369 = vsub.f32 %v362, %v363
    %v370 = vsub.f32 %v364, %v365
    %v371 = vsub.f32 %v366, %v367
    %v372 = vld [vmem:[%s8] sm:$0xff]
    %v373 = vld [vmem:[%s8 + $0x8] sm:$0xff]
    %v374 = vld [vmem:[%s8 + $0x10] sm:$0xff]
    %v375 = vld [vmem:[%s8 + $0x18] sm:$0xff]
    %377 = vset.pattern.permute.xlu0 0
    %378 = vperm.xlu0 %377, %v372
    %v379 = vpop.permute.xlu0 %378
    %382 = vset.pattern.permute.xlu0 0
    %383 = vperm.xlu0 %382, %v373
    %v384 = vpop.permute.xlu0 %383
    %387 = vset.pattern.permute.xlu0 0
    %388 = vperm.xlu0 %387, %v374
    %v389 = vpop.permute.xlu0 %388
    %392 = vset.pattern.permute.xlu0 0
    %393 = vperm.xlu0 %392, %v375
    %v394 = vpop.permute.xlu0 %393
    %v396 = vmul.f32 %v368, %v379
    %v397 = vmul.f32 %v369, %v384
    %v398 = vmul.f32 %v370, %v389
    %v399 = vmul.f32 %v371, %v394
    %v400 = vadd.f32 %v396, %v397
    %v401 = vadd.f32 %v400, %v398
    %v402 = vadd.f32 %v401, %v399
    %v403 = vrot.slane %v402, 4
    %v404 = vadd.f32 %v402, %v403
    %v405 = vrot.slane %v404, 2
    %v406 = vadd.f32 %v404, %v405
    %v407 = vrot.slane %v406, 1
    %v408 = vadd.f32 %v406, %v407
    %409 = vst [vmem:[#allocation2] sm:$0x1] %v408
    // Predicated region
    $region38: #{tpu_custom_call.1} parent=1 // pred_check
      _
    $region39: #{tpu_custom_call.1} parent=1 // pred_check_branch
      %411 = sbr.rel (0) target = $region41
    $region40: #{tpu_custom_call.1} parent=1 // pred_region
      %s413 = ssub.s32 16, 16
      %414 = vsyncadd [#allocation3], %s413
      %s416 = sshll.u32 [#allocation2], 4
      %s417 = int_to_ptr.vmem [resolvable:$true] %s416
      %419 = dma.vmem_to_hbm [thread:$0]  %s417, 16, %s9, [#allocation3]
    $region41: #{tpu_custom_call.1} parent=1 // pred_fallthru
      _
    // Predicated region
    $region42: #{tpu_custom_call.1} parent=1 // pred_check
      _
    $region43: #{tpu_custom_call.1} parent=1 // pred_check_branch
      %421 = sbr.rel (0) target = $region45
    $region44: #{tpu_custom_call.1} parent=1 // pred_region
      %422 = dma.done [#allocation3], 16
    $region45: #{tpu_custom_call.1} parent=1 // pred_fallthru
      _
    %423 = vsyncpa [#allocation3], 1

</llo_original>
